<compile_context>
chip_gen: v7x
topology: tpu7x:2x2x1
jax: 0.10.0
libtpu: 0.0.40
codegen_flags: <defaults>
</compile_context>

<pallas_src>
import functools

import jax
import jax.numpy as jnp
from jax.experimental import pallas as pl
from jax.experimental.pallas import tpu as pltpu


def _critic_kernel(n_layers, H, s_ref, a_ref, g_ref, *refs):
    """refs = (W0s_T, W0a_T, W0g_T, b0_col, [Wi_T, bi_col]*, wf_row, bf, out).

    All activations are (hidden, TB): hidden on sublanes, batch on lanes.
    """
    out_ref = refs[-1]
    w0s_ref, w0a_ref, w0g_ref, b0_ref = refs[0], refs[1], refs[2], refs[3]
    hidden_refs = refs[4:4 + 2 * (n_layers - 1)]
    wf_ref = refs[4 + 2 * (n_layers - 1)]
    bf_ref = refs[5 + 2 * (n_layers - 1)]

    # Layer 0: cat([s, a, g]) @ W0 fused as three partial dots (f32 accumulate).
    x = jnp.dot(w0s_ref[...], s_ref[...], preferred_element_type=jnp.float32)
    x = x + jnp.dot(w0a_ref[...], a_ref[...], preferred_element_type=jnp.float32)
    x = x + jnp.dot(w0g_ref[...], g_ref[...], preferred_element_type=jnp.float32)
    x = x + b0_ref[...]                       # (hidden, 1) broadcast across lanes
    x = jnp.maximum(x, 0.0)                   # ReLU; Dropout(0.2) == identity (eval)

    # Remaining hidden layers: Linear -> ReLU (Dropout identity).
    for i in range(n_layers - 1):
        w_ref = hidden_refs[2 * i]
        b_ref = hidden_refs[2 * i + 1]
        x = jnp.dot(w_ref[...], x.astype(w_ref.dtype),
                    preferred_element_type=jnp.float32) + b_ref[...]
        x = jnp.maximum(x, 0.0)

    # Final Linear(hidden -> 1): (1, hidden) @ (hidden, TB) -> (1, TB) lane-dense.
    z = jnp.dot(wf_ref[...], x.astype(wf_ref.dtype),
                preferred_element_type=jnp.float32) + bf_ref[...]
    q = 1.0 / (1.0 + jnp.exp(-z))             # exact sigmoid (tiny slab)
    out_ref[...] = (-q * H).astype(out_ref.dtype)


def _ceil_to(x, m):
    return (x + m - 1) // m * m


def critic_forward(state, action, goal, params, H, *,
                   block_batch=2048, matmul_dtype=jnp.float32):
    """params = [(W0, b0), ..., (W_final, b_final)]; Wi: (in, out), bi: (1, out)."""
    n_layers = len(params) - 1
    assert n_layers >= 1, "need at least one hidden layer"

    B, sd = state.shape
    ad = action.shape[1]
    gd = goal.shape[1]
    hidden = params[0][0].shape[1]

    # Batch tiling: fewest lane-aligned tiles, no wrapper-side padding (Pallas
    # masks the partial last block). TB % 128 == 0 whenever grid > 1.
    n_steps = max(1, pl.cdiv(B, block_batch))
    TB = _ceil_to(pl.cdiv(B, n_steps), 128)
    if TB >= B:
        TB = B                      # single full-array block (any B allowed)
    grid = (pl.cdiv(B, TB),)

    md = matmul_dtype

    # Inputs: transpose so batch is on the lane axis; cast to the matmul dtype
    # once here (halves the activation DMA stream for bf16), not per grid step.
    s_t = state.astype(md).T        # (sd, B)
    a_t = action.astype(md).T       # (ad, B)
    g_t = goal.astype(md).T         # (gd, B)

    # Weights: transpose to (out, in); split W0 by input source so the concat
    # never materializes. Biases stay f32 (added after f32 accumulation).
    w0, b0 = params[0]
    w0 = w0.astype(md)
    flat = [w0[:sd].T, w0[sd:sd + ad].T, w0[sd + ad:].T,
            jnp.reshape(b0.astype(jnp.float32), (hidden, 1))]
    for i in range(1, n_layers):
        w, b = params[i]
        flat += [w.astype(md).T, jnp.reshape(b.astype(jnp.float32), (-1, 1))]
    wf, bf = params[-1]
    flat += [jnp.reshape(wf.astype(md), (1, hidden)),        # (hidden, 1) -> row
             jnp.reshape(bf.astype(jnp.float32), (1, 1))]

    in_specs = [
        pl.BlockSpec((sd, TB), lambda i: (0, i)),
        pl.BlockSpec((ad, TB), lambda i: (0, i)),
        pl.BlockSpec((gd, TB), lambda i: (0, i)),
    ]
    # Weights/biases: full block, constant index_map -> VMEM-resident across grid.
    in_specs += [pl.BlockSpec(p.shape, lambda i: (0, 0)) for p in flat]

    kernel = functools.partial(_critic_kernel, n_layers, float(H))

    out = pl.pallas_call(
        kernel,
        out_shape=jax.ShapeDtypeStruct((1, B), jnp.float32),
        grid=grid,
        in_specs=in_specs,
        out_specs=pl.BlockSpec((1, TB), lambda i: (0, i)),
        compiler_params=pltpu.CompilerParams(
            dimension_semantics=("parallel",)),
    )(s_t, a_t, g_t, *flat)

    return out[0, :, None]          # (B, 1), matching the PyTorch module


def init_critic_params(key, state_dim, action_dim, layer_dim, n_layers):
    """Deterministic init mimicking nn.Linear's U(-1/sqrt(fan_in), 1/sqrt(fan_in))."""
    params = []
    in_features = state_dim + action_dim + state_dim
    dims = [layer_dim] * n_layers + [1]
    for out_features in dims:
        key, kw, kb = jax.random.split(key, 3)
        bound = 1.0 / jnp.sqrt(jnp.asarray(in_features, jnp.float32))
        w = jax.random.uniform(kw, (in_features, out_features),
                               minval=-bound, maxval=bound, dtype=jnp.float32)
        b = jax.random.uniform(kb, (1, out_features),
                               minval=-bound, maxval=bound, dtype=jnp.float32)
        params.append((w, b))
        in_features = out_features
    return params


def critic_reference(state, action, goal, params, H):
    """Pure-JAX reference for sanity checking."""
    x = jnp.concatenate([state, action, goal], axis=1).astype(jnp.float32)
    n_layers = len(params) - 1
    for i in range(n_layers):
        w, b = params[i]
        x = jnp.maximum(x @ w + b, 0.0)
    w, b = params[-1]
    q = jax.nn.sigmoid(x @ w + b)
    return -q * H


if __name__ == "__main__":
    B = 512
    state_dim = 8
    action_dim = 4
    layer_dim = 32
    n_layers = 2
    H = 5.0

    key = jax.random.PRNGKey(0)
    k_s, k_a, k_g, k_p = jax.random.split(key, 4)
    state = jax.random.normal(k_s, (B, state_dim), dtype=jnp.float32)
    action = jax.random.normal(k_a, (B, action_dim), dtype=jnp.float32)
    goal = jax.random.normal(k_g, (B, state_dim), dtype=jnp.float32)

    params = init_critic_params(k_p, state_dim, action_dim, layer_dim, n_layers)
    ref = critic_reference(state, action, goal, params, H)

    # f32-operand path; block_batch=128 -> 4 lane-aligned batch tiles (pipelined,
    # and gives a >=2-step "parallel" grid for v7x megacore).
    out = critic_forward(state, action, goal, params, H, block_batch=128)
    out = jax.block_until_ready(out)
    assert out.shape == (B, 1), out.shape
    assert jnp.allclose(out, ref, atol=2e-3, rtol=2e-3), (out[:4], ref[:4])

    # bf16 MXU-operand path (f32 accumulate / f32 elementwise).
    out_bf16 = critic_forward(state, action, goal, params, H, block_batch=128,
                              matmul_dtype=jnp.bfloat16)
    out_bf16 = jax.block_until_ready(out_bf16)
    assert out_bf16.shape == (B, 1)
    assert jnp.allclose(out_bf16, ref, atol=5e-2, rtol=5e-2), (out_bf16[:4], ref[:4])

    # Ragged batch, single tile (B < 128) -> full-array blocks, no padding.
    B2 = 50
    out2 = critic_forward(state[:B2], action[:B2], goal[:B2], params, H,
                          block_batch=128)
    out2 = jax.block_until_ready(out2)
    assert out2.shape == (B2, 1), out2.shape
    assert jnp.allclose(out2, ref[:B2], atol=2e-3, rtol=2e-3)

    # Ragged batch with grid > 1 -> exercises the masked partial last tile.
    B3 = 200
    out3 = critic_forward(state[:B3], action[:B3], goal[:B3], params, H,
                          block_batch=128)
    out3 = jax.block_until_ready(out3)
    assert out3.shape == (B3, 1), out3.shape
    assert jnp.allclose(out3, ref[:B3], atol=2e-3, rtol=2e-3)

    print("KERNEL_OK")
</pallas_src>

<mosaic_0001>
module attributes {stable_mosaic.version = 11 : i64} {
  func.func @_critic_kernel(%arg0: i32, %arg1: memref<8x128xf32, #tpu.memory_space<vmem>>, %arg2: memref<4x128xf32, #tpu.memory_space<vmem>>, %arg3: memref<8x128xf32, #tpu.memory_space<vmem>>, %arg4: memref<32x8xf32, #tpu.memory_space<vmem>>, %arg5: memref<32x4xf32, #tpu.memory_space<vmem>>, %arg6: memref<32x8xf32, #tpu.memory_space<vmem>>, %arg7: memref<32x1xf32, #tpu.memory_space<vmem>>, %arg8: memref<32x32xf32, #tpu.memory_space<vmem>>, %arg9: memref<32x1xf32, #tpu.memory_space<vmem>>, %arg10: memref<1x32xf32, #tpu.memory_space<vmem>>, %arg11: memref<1x1xf32, #tpu.memory_space<vmem>>, %arg12: memref<1x128xf32, #tpu.memory_space<vmem>>) attributes {dimension_semantics = [#tpu.dimension_semantics<parallel>], iteration_bounds = array<i64: 4>, scalar_prefetch = 0 : i64, scratch_operands = 0 : i64, tpu.core_type = #tpu.core_type<tc>, window_params = [{transform_indices = @transform_0, window_bounds = array<i64: 8, 128>}, {transform_indices = @transform_1, window_bounds = array<i64: 4, 128>}, {transform_indices = @transform_2, window_bounds = array<i64: 8, 128>}, {pipeline_mode = #tpu.pipeline_mode<synchronous>, transform_indices = @transform_3, window_bounds = array<i64: 32, 8>}, {pipeline_mode = #tpu.pipeline_mode<synchronous>, transform_indices = @transform_4, window_bounds = array<i64: 32, 4>}, {pipeline_mode = #tpu.pipeline_mode<synchronous>, transform_indices = @transform_5, window_bounds = array<i64: 32, 8>}, {pipeline_mode = #tpu.pipeline_mode<synchronous>, transform_indices = @transform_6, window_bounds = array<i64: 32, 1>}, {pipeline_mode = #tpu.pipeline_mode<synchronous>, transform_indices = @transform_7, window_bounds = array<i64: 32, 32>}, {pipeline_mode = #tpu.pipeline_mode<synchronous>, transform_indices = @transform_8, window_bounds = array<i64: 32, 1>}, {pipeline_mode = #tpu.pipeline_mode<synchronous>, transform_indices = @transform_9, window_bounds = array<i64: 1, 32>}, {pipeline_mode = #tpu.pipeline_mode<synchronous>, transform_indices = @transform_10, window_bounds = array<i64: 1, 1>}, {transform_indices = @transform_11, window_bounds = array<i64: 1, 128>}]} {
    %c0 = arith.constant 0 : index
    %c0_0 = arith.constant 0 : index
    %0 = vector.load %arg4[%c0, %c0_0] : memref<32x8xf32, #tpu.memory_space<vmem>>, vector<32x8xf32>
    %c0_1 = arith.constant 0 : index
    %c0_2 = arith.constant 0 : index
    %1 = vector.load %arg1[%c0_1, %c0_2] : memref<8x128xf32, #tpu.memory_space<vmem>>, vector<8x128xf32>
    %cst = arith.constant dense<0.000000e+00> : vector<32x128xf32>
    %2 = tpu.matmul %0, %1, %cst {dimension_numbers = #tpu.dot_dimension_numbers<[1], [0], [0], [1], [0, 0, 1, 1], [], []>} : vector<32x8xf32>, vector<8x128xf32>, vector<32x128xf32> -> vector<32x128xf32>
    %c0_3 = arith.constant 0 : index
    %c0_4 = arith.constant 0 : index
    %3 = vector.load %arg5[%c0_3, %c0_4] : memref<32x4xf32, #tpu.memory_space<vmem>>, vector<32x4xf32>
    %c0_5 = arith.constant 0 : index
    %c0_6 = arith.constant 0 : index
    %4 = vector.load %arg2[%c0_5, %c0_6] : memref<4x128xf32, #tpu.memory_space<vmem>>, vector<4x128xf32>
    %cst_7 = arith.constant dense<0.000000e+00> : vector<32x128xf32>
    %5 = tpu.matmul %3, %4, %cst_7 {dimension_numbers = #tpu.dot_dimension_numbers<[1], [0], [0], [1], [0, 0, 1, 1], [], []>} : vector<32x4xf32>, vector<4x128xf32>, vector<32x128xf32> -> vector<32x128xf32>
    %6 = arith.addf %2, %5 : vector<32x128xf32>
    %c0_8 = arith.constant 0 : index
    %c0_9 = arith.constant 0 : index
    %7 = vector.load %arg6[%c0_8, %c0_9] : memref<32x8xf32, #tpu.memory_space<vmem>>, vector<32x8xf32>
    %c0_10 = arith.constant 0 : index
    %c0_11 = arith.constant 0 : index
    %8 = vector.load %arg3[%c0_10, %c0_11] : memref<8x128xf32, #tpu.memory_space<vmem>>, vector<8x128xf32>
    %cst_12 = arith.constant dense<0.000000e+00> : vector<32x128xf32>
    %9 = tpu.matmul %7, %8, %cst_12 {dimension_numbers = #tpu.dot_dimension_numbers<[1], [0], [0], [1], [0, 0, 1, 1], [], []>} : vector<32x8xf32>, vector<8x128xf32>, vector<32x128xf32> -> vector<32x128xf32>
    %10 = arith.addf %6, %9 : vector<32x128xf32>
    %c0_13 = arith.constant 0 : index
    %c0_14 = arith.constant 0 : index
    %11 = vector.load %arg7[%c0_13, %c0_14] : memref<32x1xf32, #tpu.memory_space<vmem>>, vector<32x1xf32>
    %12 = vector.broadcast %11 : vector<32x1xf32> to vector<32x128xf32>
    %13 = arith.addf %10, %12 : vector<32x128xf32>
    %cst_15 = arith.constant 0.000000e+00 : f32
    %14 = vector.broadcast %cst_15 : f32 to vector<32x128xf32>
    %15 = arith.maximumf %13, %14 : vector<32x128xf32>
    %c0_16 = arith.constant 0 : index
    %c0_17 = arith.constant 0 : index
    %16 = vector.load %arg8[%c0_16, %c0_17] : memref<32x32xf32, #tpu.memory_space<vmem>>, vector<32x32xf32>
    %cst_18 = arith.constant dense<0.000000e+00> : vector<32x128xf32>
    %17 = tpu.matmul %16, %15, %cst_18 {dimension_numbers = #tpu.dot_dimension_numbers<[1], [0], [0], [1], [0, 0, 1, 1], [], []>} : vector<32x32xf32>, vector<32x128xf32>, vector<32x128xf32> -> vector<32x128xf32>
    %c0_19 = arith.constant 0 : index
    %c0_20 = arith.constant 0 : index
    %18 = vector.load %arg9[%c0_19, %c0_20] : memref<32x1xf32, #tpu.memory_space<vmem>>, vector<32x1xf32>
    %19 = vector.broadcast %18 : vector<32x1xf32> to vector<32x128xf32>
    %20 = arith.addf %17, %19 : vector<32x128xf32>
    %cst_21 = arith.constant 0.000000e+00 : f32
    %21 = vector.broadcast %cst_21 : f32 to vector<32x128xf32>
    %22 = arith.maximumf %20, %21 : vector<32x128xf32>
    %c0_22 = arith.constant 0 : index
    %c0_23 = arith.constant 0 : index
    %23 = vector.load %arg10[%c0_22, %c0_23] : memref<1x32xf32, #tpu.memory_space<vmem>>, vector<1x32xf32>
    %cst_24 = arith.constant dense<0.000000e+00> : vector<1x128xf32>
    %24 = tpu.matmul %23, %22, %cst_24 {dimension_numbers = #tpu.dot_dimension_numbers<[1], [0], [0], [1], [0, 0, 1, 1], [], []>} : vector<1x32xf32>, vector<32x128xf32>, vector<1x128xf32> -> vector<1x128xf32>
    %c0_25 = arith.constant 0 : index
    %c0_26 = arith.constant 0 : index
    %25 = vector.load %arg11[%c0_25, %c0_26] : memref<1x1xf32, #tpu.memory_space<vmem>>, vector<1x1xf32>
    %26 = vector.broadcast %25 : vector<1x1xf32> to vector<1x128xf32>
    %27 = arith.addf %24, %26 : vector<1x128xf32>
    %cst_27 = arith.constant 0.000000e+00 : f32
    %28 = vector.broadcast %cst_27 : f32 to vector<1x128xf32>
    %29 = arith.subf %28, %27 : vector<1x128xf32>
    %30 = math.exp %29 : vector<1x128xf32>
    %cst_28 = arith.constant 1.000000e+00 : f32
    %31 = vector.broadcast %cst_28 : f32 to vector<1x128xf32>
    %32 = arith.addf %31, %30 : vector<1x128xf32>
    %cst_29 = arith.constant 1.000000e+00 : f32
    %33 = vector.broadcast %cst_29 : f32 to vector<1x128xf32>
    %34 = arith.divf %33, %32 : vector<1x128xf32>
    %cst_30 = arith.constant 0.000000e+00 : f32
    %35 = vector.broadcast %cst_30 : f32 to vector<1x128xf32>
    %36 = arith.subf %35, %34 : vector<1x128xf32>
    %cst_31 = arith.constant 5.000000e+00 : f32
    %37 = vector.broadcast %cst_31 : f32 to vector<1x128xf32>
    %38 = arith.mulf %36, %37 : vector<1x128xf32>
    %c0_32 = arith.constant 0 : index
    %c0_33 = arith.constant 0 : index
    %39 = vector.load %arg12[%c0_32, %c0_33] : memref<1x128xf32, #tpu.memory_space<vmem>>, vector<1x128xf32>
    tpu.vector_store %arg12[%c0_32, %c0_33], %38 {strides = array<i32>} : memref<1x128xf32, #tpu.memory_space<vmem>>, vector<1x128xf32>,
    return
  }
  func.func @transform_0(%arg0: i32) -> (i32, i32) {
    %c0_i32 = arith.constant 0 : i32
    %c0_i32_0 = arith.constant 0 : i32
    return %c0_i32, %arg0 : i32, i32
  }
  func.func @transform_1(%arg0: i32) -> (i32, i32) {
    %c0_i32 = arith.constant 0 : i32
    %c0_i32_0 = arith.constant 0 : i32
    return %c0_i32, %arg0 : i32, i32
  }
  func.func @transform_2(%arg0: i32) -> (i32, i32) {
    %c0_i32 = arith.constant 0 : i32
    %c0_i32_0 = arith.constant 0 : i32
    return %c0_i32, %arg0 : i32, i32
  }
  func.func @transform_3(%arg0: i32) -> (i32, i32) {
    %c0_i32 = arith.constant 0 : i32
    %c0_i32_0 = arith.constant 0 : i32
    %c0_i32_1 = arith.constant 0 : i32
    return %c0_i32, %c0_i32_0 : i32, i32
  }
  func.func @transform_4(%arg0: i32) -> (i32, i32) {
    %c0_i32 = arith.constant 0 : i32
    %c0_i32_0 = arith.constant 0 : i32
    %c0_i32_1 = arith.constant 0 : i32
    return %c0_i32, %c0_i32_0 : i32, i32
  }
  func.func @transform_5(%arg0: i32) -> (i32, i32) {
    %c0_i32 = arith.constant 0 : i32
    %c0_i32_0 = arith.constant 0 : i32
    %c0_i32_1 = arith.constant 0 : i32
    return %c0_i32, %c0_i32_0 : i32, i32
  }
  func.func @transform_6(%arg0: i32) -> (i32, i32) {
    %c0_i32 = arith.constant 0 : i32
    %c0_i32_0 = arith.constant 0 : i32
    %c0_i32_1 = arith.constant 0 : i32
    return %c0_i32, %c0_i32_0 : i32, i32
  }
  func.func @transform_7(%arg0: i32) -> (i32, i32) {
    %c0_i32 = arith.constant 0 : i32
    %c0_i32_0 = arith.constant 0 : i32
    %c0_i32_1 = arith.constant 0 : i32
    return %c0_i32, %c0_i32_0 : i32, i32
  }
  func.func @transform_8(%arg0: i32) -> (i32, i32) {
    %c0_i32 = arith.constant 0 : i32
    %c0_i32_0 = arith.constant 0 : i32
    %c0_i32_1 = arith.constant 0 : i32
    return %c0_i32, %c0_i32_0 : i32, i32
  }
  func.func @transform_9(%arg0: i32) -> (i32, i32) {
    %c0_i32 = arith.constant 0 : i32
    %c0_i32_0 = arith.constant 0 : i32
    %c0_i32_1 = arith.constant 0 : i32
    return %c0_i32, %c0_i32_0 : i32, i32
  }
  func.func @transform_10(%arg0: i32) -> (i32, i32) {
    %c0_i32 = arith.constant 0 : i32
    %c0_i32_0 = arith.constant 0 : i32
    %c0_i32_1 = arith.constant 0 : i32
    return %c0_i32, %c0_i32_0 : i32, i32
  }
  func.func @transform_11(%arg0: i32) -> (i32, i32) {
    %c0_i32 = arith.constant 0 : i32
    %c0_i32_0 = arith.constant 0 : i32
    return %c0_i32, %arg0 : i32, i32
  }
}

</mosaic_0001>

<llo_original>
// kernel: tpu_custom_call.1
$region0: #{tpu_custom_call.1}
  #allocation0 [shape = 'u32[]', space=smem, size = 0x4, offset = 0x4, fixed_abs, tag = 'smem constant byte address 0x4 - core index']
  #allocation1 [shape = 'u32[144,128]{1,0:T(1,128)}', space=vmem, size = 0x12000, scoped, tag = 'internal scratch']
  #allocation2 [shape = 'f32[1,1]{1,0:T(1,128)S(1)}', space=vmem, size = 0x200, scoped, tag = 'scoped memory for tpu_custom_call.1']
  %s0 = inlined_call_operand.vmem [shape: f32[8,512], index: 0, kind: input, shape index: {}]
  %s1 = inlined_call_operand.vmem [shape: f32[4,512], index: 1, kind: input, shape index: {}]
  %s2 = inlined_call_operand.vmem [shape: f32[8,512], index: 2, kind: input, shape index: {}]
  %s3 = inlined_call_operand.vmem [shape: f32[32,8], index: 3, kind: input, shape index: {}]
  %s4 = inlined_call_operand.vmem [shape: f32[32,4], index: 4, kind: input, shape index: {}]
  %s5 = inlined_call_operand.vmem [shape: f32[32,8], index: 5, kind: input, shape index: {}]
  %s6 = inlined_call_operand.vmem [shape: f32[32,1], index: 6, kind: input, shape index: {}]
  %s7 = inlined_call_operand.vmem [shape: f32[32,32], index: 7, kind: input, shape index: {}]
  %s8 = inlined_call_operand.vmem [shape: f32[32,1], index: 8, kind: input, shape index: {}]
  %s9 = inlined_call_operand.vmem [shape: f32[1,32], index: 9, kind: input, shape index: {}]
  %s10 = inlined_call_operand.<no memory space> [shape: f32[1,1], index: 10, kind: input, shape index: {}]
  %s11 = inlined_call_operand.hbm [shape: f32[1,512], index: 11, kind: output, shape index: {}]
  %s12 = sld [smem:[#allocation0]]
  $region77: #{tpu_custom_call.1} parent=0
    _
  %s14 = ssub.s32 1, %s12
  %s15 = scalar_select 0, %s14, %s12
  %v16 = vstv %s10
  %17 = vst [vmem:[#allocation2] sm:$0x1] %v16
  $region1: #{tpu_custom_call.1} parent=0
    #allocation3 [shape = 'u8[1024]{0}', space=vmem, size = 0x400, scoped, tag = 'output window, operand 0']
    #allocation4 [shape = 's32[2]{0}', space=sflag, size = 0x8, scoped, tag = 'scoped memory for tpu_custom_call.1']
    %18 = vsyncpa [#allocation4], 0
    %s19 = scalar_lea.sflag [#allocation4], 1
    %20 = vsyncpa %s19, 0
    loop: start=0, step=1, limit=6
    $region2: #{tpu_custom_call.1} parent=1 // loop_pre_header
      _
    $region3: #{tpu_custom_call.1} parent=1 // loop_header
      %s22 = sphi 0, %s26
      %p23 = scmp.ge.s32.totalorder %s22, 6
      %s32 = sphi 0, %s34
      %s35 = sphi 0, %s32
      %s36 = sphi 0, %s35
      %s52 = sphi 0, %s36
      %s58 = sphi 0, %s60
      %s61 = sphi 0, %s58
      %s62 = sphi 0, %s61
      %s78 = sphi 0, %s62
      %s84 = sphi 0, %s86
      %s87 = sphi 0, %s84
      %s88 = sphi 0, %s87
      %s104 = sphi 0, %s88
      %s108 = sphi 0, %s108
      %s110 = sphi 0, %s108
      %s111 = sphi 0, %s110
      %s125 = sphi 0, %s111
      %s129 = sphi 0, %s129
      %s131 = sphi 0, %s129
      %s132 = sphi 0, %s131
      %s146 = sphi 0, %s132
      %s150 = sphi 0, %s150
      %s152 = sphi 0, %s150
      %s153 = sphi 0, %s152
      %s167 = sphi 0, %s153
      %s171 = sphi 0, %s171
      %s173 = sphi 0, %s171
      %s174 = sphi 0, %s173
      %s188 = sphi 0, %s174
      %s192 = sphi 0, %s192
      %s194 = sphi 0, %s192
      %s195 = sphi 0, %s194
      %s209 = sphi 0, %s195
      %s213 = sphi 0, %s213
      %s215 = sphi 0, %s213
      %s216 = sphi 0, %s215
      %s230 = sphi 0, %s216
      %s234 = sphi 0, %s234
      %s236 = sphi 0, %s234
      %s237 = sphi 0, %s236
      %s251 = sphi 0, %s237
      %s255 = sphi 0, %s255
      %s257 = sphi 0, %s255
      %s258 = sphi 0, %s257
      %s272 = sphi 0, %s258
      %s278 = sphi 0, %s280
      %s281 = sphi 0, %s278
      %s282 = sphi 0, %s281
      %s298 = sphi 0, %s282
    $region4: #{tpu_custom_call.1} parent=1 // loop_header_branch
      %25 = sbr.rel (%p23) target = $region8
    $region5: #{tpu_custom_call.1} parent=1 // loop_body
      %s27 = ssub.s32 %s22, 1
      %s28 = ssub.s32 %s22, 2
      %s29 = sadd.s32 %s22, 1
      %s30 = ssub.s32 %s22, %s29
      %p31 = scmp.eq.s32.totalorder %s30, 0
      %s33 = sadd.s32 %s32, 1
      %s34 = scalar_select %p31, %s32, %s33
      %p37 = pneg %p31
      %p38 = scmp.eq.s32.totalorder %s22, 3
      %p39 = por %p37, %p38
      %p40 = scmp.ne.s32.totalorder %s32, %s35
      %p41 = scmp.eq.s32.totalorder %s22, 0
      %p42 = por %p40, %p41
      %p43 = scmp.ne.s32.totalorder %s32, %s35
      %p44 = scmp.eq.s32.totalorder %s27, 3
      %p45 = por %p43, %p44
      %p46 = scmp.ne.s32.totalorder %s35, %s36
      %p47 = scmp.eq.s32.totalorder %s27, 0
      %p48 = por %p46, %p47
      %p49 = scmp.ne.s32.totalorder %s35, %s36
      %p50 = scmp.eq.s32.totalorder %s28, 3
      %p51 = por %p49, %p50
      %p53 = scmp.ne.s32.totalorder %s36, %s52
      %p54 = scmp.eq.s32.totalorder %s28, 0
      %p55 = por %p53, %p54
      %s56 = ssub.s32 %s22, %s29
      %p57 = scmp.eq.s32.totalorder %s56, 0
      %s59 = sadd.s32 %s58, 1
      %s60 = scalar_select %p57, %s58, %s59
      %p63 = pneg %p57
      %p64 = scmp.eq.s32.totalorder %s22, 3
      %p65 = por %p63, %p64
      %p66 = scmp.ne.s32.totalorder %s58, %s61
      %p67 = scmp.eq.s32.totalorder %s22, 0
      %p68 = por %p66, %p67
      %p69 = scmp.ne.s32.totalorder %s58, %s61
      %p70 = scmp.eq.s32.totalorder %s27, 3
      %p71 = por %p69, %p70
      %p72 = scmp.ne.s32.totalorder %s61, %s62
      %p73 = scmp.eq.s32.totalorder %s27, 0
      %p74 = por %p72, %p73
      %p75 = scmp.ne.s32.totalorder %s61, %s62
      %p76 = scmp.eq.s32.totalorder %s28, 3
      %p77 = por %p75, %p76
      %p79 = scmp.ne.s32.totalorder %s62, %s78
      %p80 = scmp.eq.s32.totalorder %s28, 0
      %p81 = por %p79, %p80
      %s82 = ssub.s32 %s22, %s29
      %p83 = scmp.eq.s32.totalorder %s82, 0
      %s85 = sadd.s32 %s84, 1
      %s86 = scalar_select %p83, %s84, %s85
      %p89 = pneg %p83
      %p90 = scmp.eq.s32.totalorder %s22, 3
      %p91 = por %p89, %p90
      %p92 = scmp.ne.s32.totalorder %s84, %s87
      %p93 = scmp.eq.s32.totalorder %s22, 0
      %p94 = por %p92, %p93
      %p95 = scmp.ne.s32.totalorder %s84, %s87
      %p96 = scmp.eq.s32.totalorder %s27, 3
      %p97 = por %p95, %p96
      %p98 = scmp.ne.s32.totalorder %s87, %s88
      %p99 = scmp.eq.s32.totalorder %s27, 0
      %p100 = por %p98, %p99
      %p101 = scmp.ne.s32.totalorder %s87, %s88
      %p102 = scmp.eq.s32.totalorder %s28, 3
      %p103 = por %p101, %p102
      %p105 = scmp.ne.s32.totalorder %s88, %s104
      %p106 = scmp.eq.s32.totalorder %s28, 0
      %p107 = por %p105, %p106
      %s109 = sadd.s32 %s108, 1
      %p112 = scmp.eq.s32.totalorder %s22, 3
      %p113 = scmp.ne.s32.totalorder %s108, %s110
      %p114 = scmp.eq.s32.totalorder %s22, 0
      %p115 = por %p113, %p114
      %p116 = scmp.ne.s32.totalorder %s108, %s110
      %p117 = scmp.eq.s32.totalorder %s27, 3
      %p118 = por %p116, %p117
      %p119 = scmp.ne.s32.totalorder %s110, %s111
      %p120 = scmp.eq.s32.totalorder %s27, 0
      %p121 = por %p119, %p120
      %p122 = scmp.ne.s32.totalorder %s110, %s111
      %p123 = scmp.eq.s32.totalorder %s28, 3
      %p124 = por %p122, %p123
      %p126 = scmp.ne.s32.totalorder %s111, %s125
      %p127 = scmp.eq.s32.totalorder %s28, 0
      %p128 = por %p126, %p127
      %s130 = sadd.s32 %s129, 1
      %p133 = scmp.eq.s32.totalorder %s22, 3
      %p134 = scmp.ne.s32.totalorder %s129, %s131
      %p135 = scmp.eq.s32.totalorder %s22, 0
      %p136 = por %p134, %p135
      %p137 = scmp.ne.s32.totalorder %s129, %s131
      %p138 = scmp.eq.s32.totalorder %s27, 3
      %p139 = por %p137, %p138
      %p140 = scmp.ne.s32.totalorder %s131, %s132
      %p141 = scmp.eq.s32.totalorder %s27, 0
      %p142 = por %p140, %p141
      %p143 = scmp.ne.s32.totalorder %s131, %s132
      %p144 = scmp.eq.s32.totalorder %s28, 3
      %p145 = por %p143, %p144
      %p147 = scmp.ne.s32.totalorder %s132, %s146
      %p148 = scmp.eq.s32.totalorder %s28, 0
      %p149 = por %p147, %p148
      %s151 = sadd.s32 %s150, 1
      %p154 = scmp.eq.s32.totalorder %s22, 3
      %p155 = scmp.ne.s32.totalorder %s150, %s152
      %p156 = scmp.eq.s32.totalorder %s22, 0
      %p157 = por %p155, %p156
      %p158 = scmp.ne.s32.totalorder %s150, %s152
      %p159 = scmp.eq.s32.totalorder %s27, 3
      %p160 = por %p158, %p159
      %p161 = scmp.ne.s32.totalorder %s152, %s153
      %p162 = scmp.eq.s32.totalorder %s27, 0
      %p163 = por %p161, %p162
      %p164 = scmp.ne.s32.totalorder %s152, %s153
      %p165 = scmp.eq.s32.totalorder %s28, 3
      %p166 = por %p164, %p165
      %p168 = scmp.ne.s32.totalorder %s153, %s167
      %p169 = scmp.eq.s32.totalorder %s28, 0
      %p170 = por %p168, %p169
      %s172 = sadd.s32 %s171, 1
      %p175 = scmp.eq.s32.totalorder %s22, 3
      %p176 = scmp.ne.s32.totalorder %s171, %s173
      %p177 = scmp.eq.s32.totalorder %s22, 0
      %p178 = por %p176, %p177
      %p179 = scmp.ne.s32.totalorder %s171, %s173
      %p180 = scmp.eq.s32.totalorder %s27, 3
      %p181 = por %p179, %p180
      %p182 = scmp.ne.s32.totalorder %s173, %s174
      %p183 = scmp.eq.s32.totalorder %s27, 0
      %p184 = por %p182, %p183
      %p185 = scmp.ne.s32.totalorder %s173, %s174
      %p186 = scmp.eq.s32.totalorder %s28, 3
      %p187 = por %p185, %p186
      %p189 = scmp.ne.s32.totalorder %s174, %s188
      %p190 = scmp.eq.s32.totalorder %s28, 0
      %p191 = por %p189, %p190
      %s193 = sadd.s32 %s192, 1
      %p196 = scmp.eq.s32.totalorder %s22, 3
      %p197 = scmp.ne.s32.totalorder %s192, %s194
      %p198 = scmp.eq.s32.totalorder %s22, 0
      %p199 = por %p197, %p198
      %p200 = scmp.ne.s32.totalorder %s192, %s194
      %p201 = scmp.eq.s32.totalorder %s27, 3
      %p202 = por %p200, %p201
      %p203 = scmp.ne.s32.totalorder %s194, %s195
      %p204 = scmp.eq.s32.totalorder %s27, 0
      %p205 = por %p203, %p204
      %p206 = scmp.ne.s32.totalorder %s194, %s195
      %p207 = scmp.eq.s32.totalorder %s28, 3
      %p208 = por %p206, %p207
      %p210 = scmp.ne.s32.totalorder %s195, %s209
      %p211 = scmp.eq.s32.totalorder %s28, 0
      %p212 = por %p210, %p211
      %s214 = sadd.s32 %s213, 1
      %p217 = scmp.eq.s32.totalorder %s22, 3
      %p218 = scmp.ne.s32.totalorder %s213, %s215
      %p219 = scmp.eq.s32.totalorder %s22, 0
      %p220 = por %p218, %p219
      %p221 = scmp.ne.s32.totalorder %s213, %s215
      %p222 = scmp.eq.s32.totalorder %s27, 3
      %p223 = por %p221, %p222
      %p224 = scmp.ne.s32.totalorder %s215, %s216
      %p225 = scmp.eq.s32.totalorder %s27, 0
      %p226 = por %p224, %p225
      %p227 = scmp.ne.s32.totalorder %s215, %s216
      %p228 = scmp.eq.s32.totalorder %s28, 3
      %p229 = por %p227, %p228
      %p231 = scmp.ne.s32.totalorder %s216, %s230
      %p232 = scmp.eq.s32.totalorder %s28, 0
      %p233 = por %p231, %p232
      %s235 = sadd.s32 %s234, 1
      %p238 = scmp.eq.s32.totalorder %s22, 3
      %p239 = scmp.ne.s32.totalorder %s234, %s236
      %p240 = scmp.eq.s32.totalorder %s22, 0
      %p241 = por %p239, %p240
      %p242 = scmp.ne.s32.totalorder %s234, %s236
      %p243 = scmp.eq.s32.totalorder %s27, 3
      %p244 = por %p242, %p243
      %p245 = scmp.ne.s32.totalorder %s236, %s237
      %p246 = scmp.eq.s32.totalorder %s27, 0
      %p247 = por %p245, %p246
      %p248 = scmp.ne.s32.totalorder %s236, %s237
      %p249 = scmp.eq.s32.totalorder %s28, 3
      %p250 = por %p248, %p249
      %p252 = scmp.ne.s32.totalorder %s237, %s251
      %p253 = scmp.eq.s32.totalorder %s28, 0
      %p254 = por %p252, %p253
      %s256 = sadd.s32 %s255, 1
      %p259 = scmp.eq.s32.totalorder %s22, 3
      %p260 = scmp.ne.s32.totalorder %s255, %s257
      %p261 = scmp.eq.s32.totalorder %s22, 0
      %p262 = por %p260, %p261
      %p263 = scmp.ne.s32.totalorder %s255, %s257
      %p264 = scmp.eq.s32.totalorder %s27, 3
      %p265 = por %p263, %p264
      %p266 = scmp.ne.s32.totalorder %s257, %s258
      %p267 = scmp.eq.s32.totalorder %s27, 0
      %p268 = por %p266, %p267
      %p269 = scmp.ne.s32.totalorder %s257, %s258
      %p270 = scmp.eq.s32.totalorder %s28, 3
      %p271 = por %p269, %p270
      %p273 = scmp.ne.s32.totalorder %s258, %s272
      %p274 = scmp.eq.s32.totalorder %s28, 0
      %p275 = por %p273, %p274
      %s276 = ssub.s32 %s22, %s29
      %p277 = scmp.eq.s32.totalorder %s276, 0
      %s279 = sadd.s32 %s278, 1
      %s280 = scalar_select %p277, %s278, %s279
      %p283 = pneg %p277
      %p284 = scmp.eq.s32.totalorder %s22, 3
      %p285 = por %p283, %p284
      %p286 = scmp.ne.s32.totalorder %s278, %s281
      %p287 = scmp.eq.s32.totalorder %s22, 0
      %p288 = por %p286, %p287
      %p289 = scmp.ne.s32.totalorder %s278, %s281
      %p290 = scmp.eq.s32.totalorder %s27, 3
      %p291 = por %p289, %p290
      %p292 = scmp.ne.s32.totalorder %s281, %s282
      %p293 = scmp.eq.s32.totalorder %s27, 0
      %p294 = por %p292, %p293
      %p295 = scmp.ne.s32.totalorder %s281, %s282
      %p296 = scmp.eq.s32.totalorder %s28, 3
      %p297 = por %p295, %p296
      %p299 = scmp.ne.s32.totalorder %s282, %s298
      %p300 = scmp.eq.s32.totalorder %s28, 0
      %p301 = por %p299, %p300
      %p302 = scmp.le.s32.totalorder 1, %s22
      %p303 = scmp.lt.s32.totalorder %s22, 5
      %p304 = pnand %p302, %p303
      %p305 = pneg %p304
      // Predicated region
      $region9: #{tpu_custom_call.1} parent=5 // pred_check
        _
      $region10: #{tpu_custom_call.1} parent=5 // pred_check_branch
        %307 = sbr.rel (%p304) target = $region12
      $region11: #{tpu_custom_call.1} parent=5 // pred_region
        %s308 = ssub.s32 %s22, 1
        // Predicated region
        $region13: #{tpu_custom_call.1} parent=11 // pred_check
          %p309 = pneg %p121
        $region14: #{tpu_custom_call.1} parent=11 // pred_check_branch
          %311 = sbr.rel (%p309) target = $region16
        $region15: #{tpu_custom_call.1} parent=11 // pred_region
          _
        $region16: #{tpu_custom_call.1} parent=11 // pred_fallthru
          _
        // Predicated region
        $region17: #{tpu_custom_call.1} parent=11 // pred_check
          %p312 = pneg %p142
        $region18: #{tpu_custom_call.1} parent=11 // pred_check_branch
          %314 = sbr.rel (%p312) target = $region20
        $region19: #{tpu_custom_call.1} parent=11 // pred_region
          _
        $region20: #{tpu_custom_call.1} parent=11 // pred_fallthru
          _
        // Predicated region
        $region21: #{tpu_custom_call.1} parent=11 // pred_check
          %p315 = pneg %p163
        $region22: #{tpu_custom_call.1} parent=11 // pred_check_branch
          %317 = sbr.rel (%p315) target = $region24
        $region23: #{tpu_custom_call.1} parent=11 // pred_region
          _
        $region24: #{tpu_custom_call.1} parent=11 // pred_fallthru
          _
        // Predicated region
        $region25: #{tpu_custom_call.1} parent=11 // pred_check
          %p318 = pneg %p184
        $region26: #{tpu_custom_call.1} parent=11 // pred_check_branch
          %320 = sbr.rel (%p318) target = $region28
        $region27: #{tpu_custom_call.1} parent=11 // pred_region
          _
        $region28: #{tpu_custom_call.1} parent=11 // pred_fallthru
          _
        // Predicated region
        $region29: #{tpu_custom_call.1} parent=11 // pred_check
          %p321 = pneg %p205
        $region30: #{tpu_custom_call.1} parent=11 // pred_check_branch
          %323 = sbr.rel (%p321) target = $region32
        $region31: #{tpu_custom_call.1} parent=11 // pred_region
          _
        $region32: #{tpu_custom_call.1} parent=11 // pred_fallthru
          _
        // Predicated region
        $region33: #{tpu_custom_call.1} parent=11 // pred_check
          %p324 = pneg %p226
        $region34: #{tpu_custom_call.1} parent=11 // pred_check_branch
          %326 = sbr.rel (%p324) target = $region36
        $region35: #{tpu_custom_call.1} parent=11 // pred_region
          _
        $region36: #{tpu_custom_call.1} parent=11 // pred_fallthru
          _
        // Predicated region
        $region37: #{tpu_custom_call.1} parent=11 // pred_check
          %p327 = pneg %p247
        $region38: #{tpu_custom_call.1} parent=11 // pred_check_branch
          %329 = sbr.rel (%p327) target = $region40
        $region39: #{tpu_custom_call.1} parent=11 // pred_region
          _
        $region40: #{tpu_custom_call.1} parent=11 // pred_fallthru
          _
        // Predicated region
        $region41: #{tpu_custom_call.1} parent=11 // pred_check
          %p330 = pneg %p268
        $region42: #{tpu_custom_call.1} parent=11 // pred_check_branch
          %332 = sbr.rel (%p330) target = $region44
        $region43: #{tpu_custom_call.1} parent=11 // pred_region
          _
        $region44: #{tpu_custom_call.1} parent=11 // pred_fallthru
          _
      $region12: #{tpu_custom_call.1} parent=5 // pred_fallthru
        _
      %p333 = scmp.lt.s32.totalorder %s22, 4
      // Predicated region
      $region45: #{tpu_custom_call.1} parent=5 // pred_check
        %p334 = pneg %p333
      $region46: #{tpu_custom_call.1} parent=5 // pred_check_branch
        %336 = sbr.rel (%p334) target = $region48
      $region47: #{tpu_custom_call.1} parent=5 // pred_region
        // Predicated region
        $region49: #{tpu_custom_call.1} parent=47 // pred_check
          %p337 = pneg %p42
        $region50: #{tpu_custom_call.1} parent=47 // pred_check_branch
          %339 = sbr.rel (%p337) target = $region52
        $region51: #{tpu_custom_call.1} parent=47 // pred_region
          %p340 = scmp.lt.s32.totalorder %s22, 3
          %s341 = scalar_select %p340, %s22, 3
          %s342 = smul.addr %s341, 8
          %s343 = scalar_lea.vmem %s0, %s342
        $region52: #{tpu_custom_call.1} parent=47 // pred_fallthru
          _
        // Predicated region
        $region53: #{tpu_custom_call.1} parent=47 // pred_check
          %p344 = pneg %p68
        $region54: #{tpu_custom_call.1} parent=47 // pred_check_branch
          %346 = sbr.rel (%p344) target = $region56
        $region55: #{tpu_custom_call.1} parent=47 // pred_region
          %p347 = scmp.lt.s32.totalorder %s22, 3
          %s348 = scalar_select %p347, %s22, 3
          %s349 = smul.addr %s348, 4
          %s350 = scalar_lea.vmem %s1, %s349
        $region56: #{tpu_custom_call.1} parent=47 // pred_fallthru
          _
        // Predicated region
        $region57: #{tpu_custom_call.1} parent=47 // pred_check
          %p351 = pneg %p94
        $region58: #{tpu_custom_call.1} parent=47 // pred_check_branch
          %353 = sbr.rel (%p351) target = $region60
        $region59: #{tpu_custom_call.1} parent=47 // pred_region
          %p354 = scmp.lt.s32.totalorder %s22, 3
          %s355 = scalar_select %p354, %s22, 3
          %s356 = smul.addr %s355, 8
          %s357 = scalar_lea.vmem %s2, %s356
        $region60: #{tpu_custom_call.1} parent=47 // pred_fallthru
          _
      $region48: #{tpu_custom_call.1} parent=5 // pred_fallthru
        _
      %p358 = scmp.le.s32.totalorder 1, %s22
      %p359 = scmp.lt.s32.totalorder %s22, 5
      %p360 = pnand %p358, %p359
      %p361 = pneg %p360
      // Predicated region
      $region61: #{tpu_custom_call.1} parent=5 // pred_check
        _
      $region62: #{tpu_custom_call.1} parent=5 // pred_check_branch
        %363 = sbr.rel (%p360) target = $region64
      $region63: #{tpu_custom_call.1} parent=5 // pred_region
        %s364 = ssub.s32 %s22, 1
        %p365 = scmp.lt.s32.totalorder %s27, 3
        %s366 = scalar_select %p365, %s27, 3
        %s367 = smul.addr %s366, 8
        %s368 = scalar_lea.vmem %s0, %s367
        %p369 = pneg %p48
        %p370 = pneg %p45
        %p371 = scmp.lt.s32.totalorder %s27, 3
        %s372 = scalar_select %p371, %s27, 3
        %s373 = smul.addr %s372, 4
        %s374 = scalar_lea.vmem %s1, %s373
        %p375 = pneg %p74
        %p376 = pneg %p71
        %p377 = scmp.lt.s32.totalorder %s27, 3
        %s378 = scalar_select %p377, %s27, 3
        %s379 = smul.addr %s378, 8
        %s380 = scalar_lea.vmem %s2, %s379
        %p381 = pneg %p100
        %p382 = pneg %p97
        %p383 = pneg %p121
        %p384 = pneg %p118
        %p385 = pneg %p142
        %p386 = pneg %p139
        %p387 = pneg %p163
        %p388 = pneg %p160
        %p389 = pneg %p184
        %p390 = pneg %p181
        %p391 = pneg %p205
        %p392 = pneg %p202
        %p393 = pneg %p226
        %p394 = pneg %p223
        %p395 = pneg %p247
        %p396 = pneg %p244
        %p397 = pneg %p268
        %p398 = pneg %p265
        %p399 = pneg %p294
        %p400 = pneg %p291
        %s401 = sand.u32 %s281, 1
        %s402 = scalar_lea.sflag [#allocation4], %s401
        %s403 = sand.u32 %s281, 1
        %s404 = scalar_lea.vmem [#allocation3], %s403
        %p405 = scmp.lt.s32.totalorder %s27, 3
        %s406 = scalar_select %p405, %s27, 3
        %s407 = smul.addr %s406, 8
        %s408 = scalar_lea.vmem %s0, %s407
        %p409 = scmp.lt.s32.totalorder %s27, 3
        %s410 = scalar_select %p409, %s27, 3
        %s411 = smul.addr %s410, 4
        %s412 = scalar_lea.vmem %s1, %s411
        %p413 = scmp.lt.s32.totalorder %s27, 3
        %s414 = scalar_select %p413, %s27, 3
        %s415 = smul.addr %s414, 8
        %s416 = scalar_lea.vmem %s2, %s415
        %v417 = vld [vmem:[%s3] sm:$0xff]
        %v418 = vld [vmem:[%s3 + $0x8] sm:$0xff]
        %v419 = vld [vmem:[%s3 + $0x10] sm:$0xff]
        %v420 = vld [vmem:[%s3 + $0x18] sm:$0xff]
        %v421 = vld [vmem:[%s408] sm:$0xff]
        %v422 = vld [vmem:[%s4] sm:$0xff]
        %v423 = vld [vmem:[%s4 + $0x8] sm:$0xff]
        %v424 = vld [vmem:[%s4 + $0x10] sm:$0xff]
        %v425 = vld [vmem:[%s4 + $0x18] sm:$0xff]
        %v426 = vld [vmem:[%s412] sm:$0xf]
        %vm427 = vcmask 31744
        %v429 = vsel %vm427, %v422, 0
        %v432 = vsel %vm427, %v423, 0
        %v435 = vsel %vm427, %v424, 0
        %v438 = vsel %vm427, %v425, 0
        %vm440 = vcmask 1043456
        %v442 = vsel %vm440, %v426, 0
        %444 = vmatprep.subr.mxu0 0.0
        %445 = vmatpush1.msra.mxu0 %v442
        %446 = vmatprep.subr.mxu0 0.0
        %447 = vmatpush1.msra.mxu0 0.0
        %448 = vmatprep.subr.mxu0 0.0
        %449 = vmatpush1.msra.mxu0 0.0
        %450 = vmatprep.subr.mxu0 0.0
        %451 = vmatpush1.msra.mxu0 0.0
        %452 = vmatprep.subr.mxu0 0.0
        %453 = vmatpush1.msra.mxu0 0.0
        %454 = vmatprep.subr.mxu0 0.0
        %455 = vmatpush1.msra.mxu0 0.0
        %456 = vmatprep.subr.mxu0 0.0
        %457 = vmatpush1.msra.mxu0 0.0
        %458 = vmatprep.subr.mxu0 0.0
        %459 = vmatpush1.msra.mxu0 0.0
        %460 = vmatprep.subr.mxu0 0.0
        %461 = vmatpush1.msra.mxu0 0.0
        %462 = vmatprep.subr.mxu0 0.0
        %463 = vmatpush1.msra.mxu0 0.0
        %464 = vmatprep.subr.mxu0 0.0
        %465 = vmatpush1.msra.mxu0 0.0
        %466 = vmatprep.subr.mxu0 0.0
        %467 = vmatpush1.msra.mxu0 0.0
        %468 = vmatprep.subr.mxu0 0.0
        %469 = vmatpush1.msra.mxu0 0.0
        %470 = vmatprep.subr.mxu0 0.0
        %471 = vmatpush1.msra.mxu0 0.0
        %472 = vmatprep.subr.mxu0 0.0
        %473 = vmatpush1.msra.mxu0 0.0
        %474 = vmatprep.subr.mxu0 0.0
        %475 = vmatpush1.msra.mxu0 0.0
        %476 = vmatprep.subr.mxu0 0.0
        %477 = vmatpush1.msra.mxu0 0.0
        %478 = vmatprep.subr.mxu0 0.0
        %479 = vmatpush1.msra.mxu0 0.0
        %480 = vmatprep.subr.mxu0 0.0
        %481 = vmatpush1.msra.mxu0 0.0
        %482 = vmatprep.subr.mxu0 0.0
        %483 = vmatpush1.msra.mxu0 0.0
        %484 = vmatprep.subr.mxu0 0.0
        %485 = vmatpush1.msra.mxu0 0.0
        %486 = vmatprep.subr.mxu0 0.0
        %487 = vmatpush1.msra.mxu0 0.0
        %488 = vmatprep.subr.mxu0 0.0
        %489 = vmatpush1.msra.mxu0 0.0
        %490 = vmatprep.subr.mxu0 0.0
        %491 = vmatpush1.msra.mxu0 0.0
        %492 = vmatprep.subr.mxu0 0.0
        %493 = vmatpush1.msra.mxu0 0.0
        %494 = vmatprep.subr.mxu0 0.0
        %495 = vmatpush1.msra.mxu0 0.0
        %496 = vmatprep.subr.mxu0 0.0
        %497 = vmatpush1.msra.mxu0 0.0
        %498 = vmatprep.subr.mxu0 0.0
        %499 = vmatpush1.msra.mxu0 0.0
        %500 = vmatprep.subr.mxu0 0.0
        %501 = vmatpush1.msra.mxu0 0.0
        %502 = vmatprep.subr.mxu0 0.0
        %503 = vmatpush1.msra.mxu0 0.0
        %504 = vmatprep.subr.mxu0 0.0
        %505 = vmatpush1.msra.mxu0 0.0
        %506 = vmatprep.subr.mxu0 0.0
        %507 = vmatpush1.msra.mxu0 0.0
        %508 = vmatprep.mubr.f32.mxu0 0.0
        %509 = vmatmul.mubr.f32.gmra.mrb[0].mxu0 %v429
        %v510 = vpop.f32.mrb[0].mxu0
        %v511 = vadd.f32 0.0, %v510
        %v512 = vpop.f32.mrb[0].mxu0
        %513 = vmatprep.mubr.f32.mxu0 0.0
        %514 = vmatmul.mubr.f32.gmra.mrb[0].mxu0 %v432
        %v515 = vpop.f32.mrb[0].mxu0
        %v516 = vadd.f32 0.0, %v515
        %v517 = vpop.f32.mrb[0].mxu0
        %518 = vmatprep.mubr.f32.mxu0 0.0
        %519 = vmatmul.mubr.f32.gmra.mrb[0].mxu0 %v435
        %v520 = vpop.f32.mrb[0].mxu0
        %v521 = vadd.f32 0.0, %v520
        %v522 = vpop.f32.mrb[0].mxu0
        %523 = vmatprep.mubr.f32.mxu0 0.0
        %524 = vmatmul.mubr.f32.gmra.mrb[0].mxu0 %v438
        %v525 = vpop.f32.mrb[0].mxu0
        %v526 = vadd.f32 0.0, %v525
        %v527 = vpop.f32.mrb[0].mxu0
        %528 = vdwg.mxu0
        %vm529 = vcmask 64512
        %v531 = vsel %vm529, %v417, 0
        %v534 = vsel %vm529, %v418, 0
        %v537 = vsel %vm529, %v419, 0
        %v540 = vsel %vm529, %v420, 0
        %542 = vmatprep.subr.mxu0 0.0
        %543 = vmatpush1.msra.mxu0 %v421
        %544 = vmatprep.subr.mxu0 0.0
        %545 = vmatpush1.msra.mxu0 0.0
        %546 = vmatprep.subr.mxu0 0.0
        %547 = vmatpush1.msra.mxu0 0.0
        %548 = vmatprep.subr.mxu0 0.0
        %549 = vmatpush1.msra.mxu0 0.0
        %550 = vmatprep.subr.mxu0 0.0
        %551 = vmatpush1.msra.mxu0 0.0
        %552 = vmatprep.subr.mxu0 0.0
        %553 = vmatpush1.msra.mxu0 0.0
        %554 = vmatprep.subr.mxu0 0.0
        %555 = vmatpush1.msra.mxu0 0.0
        %556 = vmatprep.subr.mxu0 0.0
        %557 = vmatpush1.msra.mxu0 0.0
        %558 = vmatprep.subr.mxu0 0.0
        %559 = vmatpush1.msra.mxu0 0.0
        %560 = vmatprep.subr.mxu0 0.0
        %561 = vmatpush1.msra.mxu0 0.0
        %562 = vmatprep.subr.mxu0 0.0
        %563 = vmatpush1.msra.mxu0 0.0
        %564 = vmatprep.subr.mxu0 0.0
        %565 = vmatpush1.msra.mxu0 0.0
        %566 = vmatprep.subr.mxu0 0.0
        %567 = vmatpush1.msra.mxu0 0.0
        %568 = vmatprep.subr.mxu0 0.0
        %569 = vmatpush1.msra.mxu0 0.0
        %570 = vmatprep.subr.mxu0 0.0
        %571 = vmatpush1.msra.mxu0 0.0
        %572 = vmatprep.subr.mxu0 0.0
        %573 = vmatpush1.msra.mxu0 0.0
        %574 = vmatprep.subr.mxu0 0.0
        %575 = vmatpush1.msra.mxu0 0.0
        %576 = vmatprep.subr.mxu0 0.0
        %577 = vmatpush1.msra.mxu0 0.0
        %578 = vmatprep.subr.mxu0 0.0
        %579 = vmatpush1.msra.mxu0 0.0
        %580 = vmatprep.subr.mxu0 0.0
        %581 = vmatpush1.msra.mxu0 0.0
        %582 = vmatprep.subr.mxu0 0.0
        %583 = vmatpush1.msra.mxu0 0.0
        %584 = vmatprep.subr.mxu0 0.0
        %585 = vmatpush1.msra.mxu0 0.0
        %586 = vmatprep.subr.mxu0 0.0
        %587 = vmatpush1.msra.mxu0 0.0
        %588 = vmatprep.subr.mxu0 0.0
        %589 = vmatpush1.msra.mxu0 0.0
        %590 = vmatprep.subr.mxu0 0.0
        %591 = vmatpush1.msra.mxu0 0.0
        %592 = vmatprep.subr.mxu0 0.0
        %593 = vmatpush1.msra.mxu0 0.0
        %594 = vmatprep.subr.mxu0 0.0
        %595 = vmatpush1.msra.mxu0 0.0
        %596 = vmatprep.subr.mxu0 0.0
        %597 = vmatpush1.msra.mxu0 0.0
        %598 = vmatprep.subr.mxu0 0.0
        %599 = vmatpush1.msra.mxu0 0.0
        %600 = vmatprep.subr.mxu0 0.0
        %601 = vmatpush1.msra.mxu0 0.0
        %602 = vmatprep.subr.mxu0 0.0
        %603 = vmatpush1.msra.mxu0 0.0
        %604 = vmatprep.subr.mxu0 0.0
        %605 = vmatpush1.msra.mxu0 0.0
        %606 = vmatprep.mubr.f32.mxu0 0.0
        %607 = vmatmul.mubr.f32.gmra.mrb[0].mxu0 %v531
        %v608 = vpop.f32.mrb[0].mxu0
        %v609 = vadd.f32 %v511, %v608
        %v610 = vpop.f32.mrb[0].mxu0
        %611 = vmatprep.mubr.f32.mxu0 0.0
        %612 = vmatmul.mubr.f32.gmra.mrb[0].mxu0 %v534
        %v613 = vpop.f32.mrb[0].mxu0
        %v614 = vadd.f32 %v516, %v613
        %v615 = vpop.f32.mrb[0].mxu0
        %616 = vmatprep.mubr.f32.mxu0 0.0
        %617 = vmatmul.mubr.f32.gmra.mrb[0].mxu0 %v537
        %v618 = vpop.f32.mrb[0].mxu0
        %v619 = vadd.f32 %v521, %v618
        %v620 = vpop.f32.mrb[0].mxu0
        %621 = vmatprep.mubr.f32.mxu0 0.0
        %622 = vmatmul.mubr.f32.gmra.mrb[0].mxu0 %v540
        %v623 = vpop.f32.mrb[0].mxu0
        %v624 = vadd.f32 %v526, %v623
        %v625 = vpop.f32.mrb[0].mxu0
        %626 = vdwg.mxu0
        %v627 = vld [vmem:[%s5] sm:$0xff]
        %v628 = vld [vmem:[%s5 + $0x8] sm:$0xff]
        %v629 = vld [vmem:[%s5 + $0x10] sm:$0xff]
        %v630 = vld [vmem:[%s5 + $0x18] sm:$0xff]
        %v631 = vld [vmem:[%s416] sm:$0xff]
        %v633 = vsel %vm529, %v627, 0
        %v636 = vsel %vm529, %v628, 0
        %v639 = vsel %vm529, %v629, 0
        %v642 = vsel %vm529, %v630, 0
        %644 = vmatprep.subr.mxu0 0.0
        %645 = vmatpush1.msra.mxu0 %v631
        %646 = vmatprep.subr.mxu0 0.0
        %647 = vmatpush1.msra.mxu0 0.0
        %648 = vmatprep.subr.mxu0 0.0
        %649 = vmatpush1.msra.mxu0 0.0
        %650 = vmatprep.subr.mxu0 0.0
        %651 = vmatpush1.msra.mxu0 0.0
        %652 = vmatprep.subr.mxu0 0.0
        %653 = vmatpush1.msra.mxu0 0.0
        %654 = vmatprep.subr.mxu0 0.0
        %655 = vmatpush1.msra.mxu0 0.0
        %656 = vmatprep.subr.mxu0 0.0
        %657 = vmatpush1.msra.mxu0 0.0
        %658 = vmatprep.subr.mxu0 0.0
        %659 = vmatpush1.msra.mxu0 0.0
        %660 = vmatprep.subr.mxu0 0.0
        %661 = vmatpush1.msra.mxu0 0.0
        %662 = vmatprep.subr.mxu0 0.0
        %663 = vmatpush1.msra.mxu0 0.0
        %664 = vmatprep.subr.mxu0 0.0
        %665 = vmatpush1.msra.mxu0 0.0
        %666 = vmatprep.subr.mxu0 0.0
        %667 = vmatpush1.msra.mxu0 0.0
        %668 = vmatprep.subr.mxu0 0.0
        %669 = vmatpush1.msra.mxu0 0.0
        %670 = vmatprep.subr.mxu0 0.0
        %671 = vmatpush1.msra.mxu0 0.0
        %672 = vmatprep.subr.mxu0 0.0
        %673 = vmatpush1.msra.mxu0 0.0
        %674 = vmatprep.subr.mxu0 0.0
        %675 = vmatpush1.msra.mxu0 0.0
        %676 = vmatprep.subr.mxu0 0.0
        %677 = vmatpush1.msra.mxu0 0.0
        %678 = vmatprep.subr.mxu0 0.0
        %679 = vmatpush1.msra.mxu0 0.0
        %680 = vmatprep.subr.mxu0 0.0
        %681 = vmatpush1.msra.mxu0 0.0
        %682 = vmatprep.subr.mxu0 0.0
        %683 = vmatpush1.msra.mxu0 0.0
        %684 = vmatprep.subr.mxu0 0.0
        %685 = vmatpush1.msra.mxu0 0.0
        %686 = vmatprep.subr.mxu0 0.0
        %687 = vmatpush1.msra.mxu0 0.0
        %688 = vmatprep.subr.mxu0 0.0
        %689 = vmatpush1.msra.mxu0 0.0
        %690 = vmatprep.subr.mxu0 0.0
        %691 = vmatpush1.msra.mxu0 0.0
        %692 = vmatprep.subr.mxu0 0.0
        %693 = vmatpush1.msra.mxu0 0.0
        %694 = vmatprep.subr.mxu0 0.0
        %695 = vmatpush1.msra.mxu0 0.0
        %696 = vmatprep.subr.mxu0 0.0
        %697 = vmatpush1.msra.mxu0 0.0
        %698 = vmatprep.subr.mxu0 0.0
        %699 = vmatpush1.msra.mxu0 0.0
        %700 = vmatprep.subr.mxu0 0.0
        %701 = vmatpush1.msra.mxu0 0.0
        %702 = vmatprep.subr.mxu0 0.0
        %703 = vmatpush1.msra.mxu0 0.0
        %704 = vmatprep.subr.mxu0 0.0
        %705 = vmatpush1.msra.mxu0 0.0
        %706 = vmatprep.subr.mxu0 0.0
        %707 = vmatpush1.msra.mxu0 0.0
        %708 = vmatprep.mubr.f32.mxu0 0.0
        %709 = vmatmul.mubr.f32.gmra.mrb[0].mxu0 %v633
        %v710 = vpop.f32.mrb[0].mxu0
        %v711 = vadd.f32 0.0, %v710
        %v712 = vpop.f32.mrb[0].mxu0
        %713 = vmatprep.mubr.f32.mxu0 0.0
        %714 = vmatmul.mubr.f32.gmra.mrb[0].mxu0 %v636
        %v715 = vpop.f32.mrb[0].mxu0
        %v716 = vadd.f32 0.0, %v715
        %v717 = vpop.f32.mrb[0].mxu0
        %718 = vmatprep.mubr.f32.mxu0 0.0
        %719 = vmatmul.mubr.f32.gmra.mrb[0].mxu0 %v639
        %v720 = vpop.f32.mrb[0].mxu0
        %v721 = vadd.f32 0.0, %v720
        %v722 = vpop.f32.mrb[0].mxu0
        %723 = vmatprep.mubr.f32.mxu0 0.0
        %724 = vmatmul.mubr.f32.gmra.mrb[0].mxu0 %v642
        %v725 = vpop.f32.mrb[0].mxu0
        %v726 = vadd.f32 0.0, %v725
        %v727 = vpop.f32.mrb[0].mxu0
        %728 = vdwg.mxu0
        %v729 = vadd.f32 %v609, %v711
        %v730 = vadd.f32 %v614, %v716
        %v731 = vadd.f32 %v619, %v721
        %v732 = vadd.f32 %v624, %v726
        %v733 = vld [vmem:[%s6] sm:$0xff]
        %v734 = vld [vmem:[%s6 + $0x8] sm:$0xff]
        %v735 = vld [vmem:[%s6 + $0x10] sm:$0xff]
        %v736 = vld [vmem:[%s6 + $0x18] sm:$0xff]
        %738 = vset.pattern.permute.xlu0 0
        %739 = vperm.xlu0 %738, %v733
        %v740 = vpop.permute.xlu0 %739
        %743 = vset.pattern.permute.xlu0 0
        %744 = vperm.xlu0 %743, %v734
        %v745 = vpop.permute.xlu0 %744
        %748 = vset.pattern.permute.xlu0 0
        %749 = vperm.xlu0 %748, %v735
        %v750 = vpop.permute.xlu0 %749
        %753 = vset.pattern.permute.xlu0 0
        %754 = vperm.xlu0 %753, %v736
        %v755 = vpop.permute.xlu0 %754
        %v757 = vadd.f32 %v729, %v740
        %v758 = vadd.f32 %v730, %v745
        %v759 = vadd.f32 %v731, %v750
        %v760 = vadd.f32 %v732, %v755
        %v761 = vmax.f32 %v757, 0.0
        %v762 = vmax.f32 %v758, 0.0
        %v763 = vmax.f32 %v759, 0.0
        %v764 = vmax.f32 %v760, 0.0
        %v765 = vld [vmem:[%s7] sm:$0xff]
        %v766 = vld [vmem:[%s7 + $0x8] sm:$0xff]
        %v767 = vld [vmem:[%s7 + $0x10] sm:$0xff]
        %v768 = vld [vmem:[%s7 + $0x18] sm:$0xff]
        %v769 = vld [vmem:[%s8] sm:$0xff]
        %v770 = vld [vmem:[%s8 + $0x8] sm:$0xff]
        %v771 = vld [vmem:[%s8 + $0x10] sm:$0xff]
        %v772 = vld [vmem:[%s8 + $0x18] sm:$0xff]
        %774 = vset.pattern.permute.xlu0 0
        %775 = vperm.xlu0 %774, %v769
        %v776 = vpop.permute.xlu0 %775
        %779 = vset.pattern.permute.xlu0 0
        %780 = vperm.xlu0 %779, %v770
        %v781 = vpop.permute.xlu0 %780
        %784 = vset.pattern.permute.xlu0 0
        %785 = vperm.xlu0 %784, %v771
        %v786 = vpop.permute.xlu0 %785
        %789 = vset.pattern.permute.xlu0 0
        %790 = vperm.xlu0 %789, %v772
        %v791 = vpop.permute.xlu0 %790
        %vm793 = vcmask 261120
        %v795 = vsel %vm793, %v765, 0
        %v798 = vsel %vm793, %v766, 0
        %v801 = vsel %vm793, %v767, 0
        %v804 = vsel %vm793, %v768, 0
        %806 = vmatprep.subr.mxu0 0.0
        %807 = vmatpush1.msra.mxu0 %v761
        %808 = vmatprep.subr.mxu0 0.0
        %809 = vmatpush1.msra.mxu0 %v762
        %810 = vmatprep.subr.mxu0 0.0
        %811 = vmatpush1.msra.mxu0 %v763
        %812 = vmatprep.subr.mxu0 0.0
        %813 = vmatpush1.msra.mxu0 %v764
        %814 = vmatprep.subr.mxu0 0.0
        %815 = vmatpush1.msra.mxu0 0.0
        %816 = vmatprep.subr.mxu0 0.0
        %817 = vmatpush1.msra.mxu0 0.0
        %818 = vmatprep.subr.mxu0 0.0
        %819 = vmatpush1.msra.mxu0 0.0
        %820 = vmatprep.subr.mxu0 0.0
        %821 = vmatpush1.msra.mxu0 0.0
        %822 = vmatprep.subr.mxu0 0.0
        %823 = vmatpush1.msra.mxu0 0.0
        %824 = vmatprep.subr.mxu0 0.0
        %825 = vmatpush1.msra.mxu0 0.0
        %826 = vmatprep.subr.mxu0 0.0
        %827 = vmatpush1.msra.mxu0 0.0
        %828 = vmatprep.subr.mxu0 0.0
        %829 = vmatpush1.msra.mxu0 0.0
        %830 = vmatprep.subr.mxu0 0.0
        %831 = vmatpush1.msra.mxu0 0.0
        %832 = vmatprep.subr.mxu0 0.0
        %833 = vmatpush1.msra.mxu0 0.0
        %834 = vmatprep.subr.mxu0 0.0
        %835 = vmatpush1.msra.mxu0 0.0
        %836 = vmatprep.subr.mxu0 0.0
        %837 = vmatpush1.msra.mxu0 0.0
        %838 = vmatprep.subr.mxu0 0.0
        %839 = vmatpush1.msra.mxu0 0.0
        %840 = vmatprep.subr.mxu0 0.0
        %841 = vmatpush1.msra.mxu0 0.0
        %842 = vmatprep.subr.mxu0 0.0
        %843 = vmatpush1.msra.mxu0 0.0
        %844 = vmatprep.subr.mxu0 0.0
        %845 = vmatpush1.msra.mxu0 0.0
        %846 = vmatprep.subr.mxu0 0.0
        %847 = vmatpush1.msra.mxu0 0.0
        %848 = vmatprep.subr.mxu0 0.0
        %849 = vmatpush1.msra.mxu0 0.0
        %850 = vmatprep.subr.mxu0 0.0
        %851 = vmatpush1.msra.mxu0 0.0
        %852 = vmatprep.subr.mxu0 0.0
        %853 = vmatpush1.msra.mxu0 0.0
        %854 = vmatprep.subr.mxu0 0.0
        %855 = vmatpush1.msra.mxu0 0.0
        %856 = vmatprep.subr.mxu0 0.0
        %857 = vmatpush1.msra.mxu0 0.0
        %858 = vmatprep.subr.mxu0 0.0
        %859 = vmatpush1.msra.mxu0 0.0
        %860 = vmatprep.subr.mxu0 0.0
        %861 = vmatpush1.msra.mxu0 0.0
        %862 = vmatprep.subr.mxu0 0.0
        %863 = vmatpush1.msra.mxu0 0.0
        %864 = vmatprep.subr.mxu0 0.0
        %865 = vmatpush1.msra.mxu0 0.0
        %866 = vmatprep.subr.mxu0 0.0
        %867 = vmatpush1.msra.mxu0 0.0
        %868 = vmatprep.subr.mxu0 0.0
        %869 = vmatpush1.msra.mxu0 0.0
        %870 = vmatprep.mubr.f32.mxu0 0.0
        %871 = vmatmul.mubr.f32.gmra.mrb[0].mxu0 %v795
        %v872 = vpop.f32.mrb[0].mxu0
        %v873 = vadd.f32 %v776, %v872
        %v874 = vpop.f32.mrb[0].mxu0
        %875 = vmatprep.mubr.f32.mxu0 0.0
        %876 = vmatmul.mubr.f32.gmra.mrb[0].mxu0 %v798
        %v877 = vpop.f32.mrb[0].mxu0
        %v878 = vadd.f32 %v781, %v877
        %v879 = vpop.f32.mrb[0].mxu0
        %880 = vmatprep.mubr.f32.mxu0 0.0
        %881 = vmatmul.mubr.f32.gmra.mrb[0].mxu0 %v801
        %v882 = vpop.f32.mrb[0].mxu0
        %v883 = vadd.f32 %v786, %v882
        %v884 = vpop.f32.mrb[0].mxu0
        %885 = vmatprep.mubr.f32.mxu0 0.0
        %886 = vmatmul.mubr.f32.gmra.mrb[0].mxu0 %v804
        %v887 = vpop.f32.mrb[0].mxu0
        %v888 = vadd.f32 %v791, %v887
        %v889 = vpop.f32.mrb[0].mxu0
        %890 = vdwg.mxu0
        %v891 = vmax.f32 %v873, 0.0
        %v892 = vmax.f32 %v878, 0.0
        %v893 = vmax.f32 %v883, 0.0
        %v894 = vmax.f32 %v888, 0.0
        %v895 = vld [vmem:[%s9] sm:$0x1]
        %v896 = vld [vmem:[#allocation2] sm:$0x1]
        %898 = vset.pattern.permute.xlu0 0
        %899 = vperm.xlu0 %898, %v896
        %v900 = vpop.permute.xlu0 %899
        %v902 = vlaneseq
        %v903 = vshrl.u32 %v902, 7
        %v904 = vsub.s32 0, %v903
        %v905 = vrot.slane %v900, %v904
        %v907 = vsel %vm793, %v895, 0
        %909 = vmatprep.subr.mxu0 0.0
        %910 = vmatpush1.msra.mxu0 %v891
        %911 = vmatprep.subr.mxu0 0.0
        %912 = vmatpush1.msra.mxu0 %v892
        %913 = vmatprep.subr.mxu0 0.0
        %914 = vmatpush1.msra.mxu0 %v893
        %915 = vmatprep.subr.mxu0 0.0
        %916 = vmatpush1.msra.mxu0 %v894
        %917 = vmatprep.subr.mxu0 0.0
        %918 = vmatpush1.msra.mxu0 0.0
        %919 = vmatprep.subr.mxu0 0.0
        %920 = vmatpush1.msra.mxu0 0.0
        %921 = vmatprep.subr.mxu0 0.0
        %922 = vmatpush1.msra.mxu0 0.0
        %923 = vmatprep.subr.mxu0 0.0
        %924 = vmatpush1.msra.mxu0 0.0
        %925 = vmatprep.subr.mxu0 0.0
        %926 = vmatpush1.msra.mxu0 0.0
        %927 = vmatprep.subr.mxu0 0.0
        %928 = vmatpush1.msra.mxu0 0.0
        %929 = vmatprep.subr.mxu0 0.0
        %930 = vmatpush1.msra.mxu0 0.0
        %931 = vmatprep.subr.mxu0 0.0
        %932 = vmatpush1.msra.mxu0 0.0
        %933 = vmatprep.subr.mxu0 0.0
        %934 = vmatpush1.msra.mxu0 0.0
        %935 = vmatprep.subr.mxu0 0.0
        %936 = vmatpush1.msra.mxu0 0.0
        %937 = vmatprep.subr.mxu0 0.0
        %938 = vmatpush1.msra.mxu0 0.0
        %939 = vmatprep.subr.mxu0 0.0
        %940 = vmatpush1.msra.mxu0 0.0
        %941 = vmatprep.subr.mxu0 0.0
        %942 = vmatpush1.msra.mxu0 0.0
        %943 = vmatprep.subr.mxu0 0.0
        %944 = vmatpush1.msra.mxu0 0.0
        %945 = vmatprep.subr.mxu0 0.0
        %946 = vmatpush1.msra.mxu0 0.0
        %947 = vmatprep.subr.mxu0 0.0
        %948 = vmatpush1.msra.mxu0 0.0
        %949 = vmatprep.subr.mxu0 0.0
        %950 = vmatpush1.msra.mxu0 0.0
        %951 = vmatprep.subr.mxu0 0.0
        %952 = vmatpush1.msra.mxu0 0.0
        %953 = vmatprep.subr.mxu0 0.0
        %954 = vmatpush1.msra.mxu0 0.0
        %955 = vmatprep.subr.mxu0 0.0
        %956 = vmatpush1.msra.mxu0 0.0
        %957 = vmatprep.subr.mxu0 0.0
        %958 = vmatpush1.msra.mxu0 0.0
        %959 = vmatprep.subr.mxu0 0.0
        %960 = vmatpush1.msra.mxu0 0.0
        %961 = vmatprep.subr.mxu0 0.0
        %962 = vmatpush1.msra.mxu0 0.0
        %963 = vmatprep.subr.mxu0 0.0
        %964 = vmatpush1.msra.mxu0 0.0
        %965 = vmatprep.subr.mxu0 0.0
        %966 = vmatpush1.msra.mxu0 0.0
        %967 = vmatprep.subr.mxu0 0.0
        %968 = vmatpush1.msra.mxu0 0.0
        %969 = vmatprep.subr.mxu0 0.0
        %970 = vmatpush1.msra.mxu0 0.0
        %971 = vmatprep.subr.mxu0 0.0
        %972 = vmatpush1.msra.mxu0 0.0
        %973 = vmatprep.mubr.f32.mxu0 0.0
        %974 = vmatmul.mubr.f32.gmra.mrb[0].mxu0 %v907
        %v975 = vpop.f32.mrb[0].mxu0
        %v976 = vadd.f32 %v905, %v975
        %v977 = vpop.f32.mrb[0].mxu0
        %978 = vdwg.mxu0
        %v979 = vsub.f32 0.0, %v976
        %v980 = vmul.f32 %v979, 1.442695
        %v981 = vpow.pop %v980
        %v982 = vadd.f32 %v981, 1.0
        %v983 = vrcp.pop %v982
        %v984 = vmul.f32 1.0, %v983
        %v985 = vsub.f32 0.0, %v984
        %v986 = vmul.f32 %v985, 5.0
        %987 = vst [vmem:[%s404] sm:$0x1] %v986
        %s988 = sand.u32 %s281, 1
        %s989 = scalar_lea.sflag [#allocation4], %s988
        %s990 = sand.u32 %s281, 1
        %s991 = scalar_lea.vmem [#allocation3], %s990
        // Predicated region
        $region65: #{tpu_custom_call.1} parent=63 // pred_check
          %p992 = pneg %p291
        $region66: #{tpu_custom_call.1} parent=63 // pred_check_branch
          %994 = sbr.rel (%p992) target = $region68
        $region67: #{tpu_custom_call.1} parent=63 // pred_region
          %s996 = ssub.s32 16, 16
          %997 = vsyncadd %s989, %s996
          %s998 = smul.addr %s27, 16
          %s999 = scalar_lea.hbm %s11, %s998
          %s1001 = sshll.u32 %s991, 4
          %s1002 = int_to_ptr.vmem [resolvable:$true] %s1001
          %1004 = dma.vmem_to_hbm [thread:$0]  %s1002, 16, %s999, %s989
        $region68: #{tpu_custom_call.1} parent=63 // pred_fallthru
          _
      $region64: #{tpu_custom_call.1} parent=5 // pred_fallthru
        _
      %p1005 = scmp.le.s32.totalorder 2, %s22
      // Predicated region
      $region69: #{tpu_custom_call.1} parent=5 // pred_check
        %p1006 = pneg %p1005
      $region70: #{tpu_custom_call.1} parent=5 // pred_check_branch
        %1008 = sbr.rel (%p1006) target = $region72
      $region71: #{tpu_custom_call.1} parent=5 // pred_region
        %s1009 = ssub.s32 %s22, 2
        // Predicated region
        $region73: #{tpu_custom_call.1} parent=71 // pred_check
          %p1010 = pneg %p297
        $region74: #{tpu_custom_call.1} parent=71 // pred_check_branch
          %1012 = sbr.rel (%p1010) target = $region76
        $region75: #{tpu_custom_call.1} parent=71 // pred_region
          %s1013 = sand.u32 %s282, 1
          %s1014 = scalar_lea.sflag [#allocation4], %s1013
          %s1015 = sand.u32 %s282, 1
          %s1016 = scalar_lea.vmem [#allocation3], %s1015
          %1017 = dma.done %s1014, 16
        $region76: #{tpu_custom_call.1} parent=71 // pred_fallthru
          _
      $region72: #{tpu_custom_call.1} parent=5 // pred_fallthru
        _
    $region6: #{tpu_custom_call.1} parent=1 // loop_footer
      %s26 = sadd.s32 1, %s22
    $region7: #{tpu_custom_call.1} parent=1 // loop_footer_branch
      %21 = sbr.rel target = $region3
    $region8: #{tpu_custom_call.1} parent=1 // loop_exit
      _
    %1018 = vsyncpa [#allocation4], 1
    %s1019 = scalar_lea.sflag [#allocation4], 1
    %1020 = vsyncpa %s1019, 1

</llo_original>
